<compile_context>
chip_gen: v5e
topology: v5e:2x2
jax: 0.10.0
libtpu: 0.0.40
codegen_flags: <defaults>
</compile_context>

<pallas_src>
import math
import jax
import jax.numpy as jnp
from jax.experimental import pallas as pl
from jax.experimental.pallas import tpu as pltpu

_LANE = 128  # TPU lane width


def _fc_arn_kernel(x_ref, w1t_ref, b1_ref, w2_ref, b2_ref, o_ref):
    # x_ref:  (D, TILE_B)   batch on lanes
    # w1t_ref:(H, D)        resident
    # b1_ref: (H, 1)        resident, lane-broadcast
    # w2_ref: (H, 1)        resident, lane-broadcast
    # b2_ref: (1,) in SMEM  scalar
    # o_ref:  (1, TILE_B)   lane-dense output
    h = jnp.dot(w1t_ref[...], x_ref[...], preferred_element_type=jnp.float32)
    h = jnp.tanh(h + b1_ref[...])
    # Second layer on VPU/XLU: per-sublane scale then reduce over H sublanes.
    y = jnp.sum(h * w2_ref[...], axis=0, keepdims=True) + b2_ref[0]
    o_ref[...] = y.astype(o_ref.dtype)


def fc_arn_forward(x_flat, w1, b1, w2, b2, *, max_tile_b=8192):
    """x_flat: (B, D) float32, w1: (D, H), b1: (H,), w2: (H, 1), b2: (1,).

    Returns (B, 1) float32.  Computes tanh(x @ w1 + b1) @ w2 + b2 with batch
    mapped to the TPU lane axis.
    """
    B, D = x_flat.shape
    H = w1.shape[1]

    # Batch tile: multiple of 128 lanes; capped so 2 x double-buffered tiles
    # stay tiny even for v7x's 64 MiB VMEM.
    tile_b = min(max_tile_b, ((B + _LANE - 1) // _LANE) * _LANE)
    b_pad = ((B + tile_b - 1) // tile_b) * tile_b

    xT = x_flat.T  # (D, B) -> batch on lanes
    if b_pad != B:
        xT = jnp.pad(xT, ((0, 0), (0, b_pad - B)))

    w1t = w1.T.astype(jnp.float32)                 # (H, D)
    b1_col = b1.reshape(H, 1).astype(jnp.float32)  # (H, 1)
    w2_col = w2.reshape(H, 1).astype(jnp.float32)  # (H, 1)
    b2_s = b2.reshape(1).astype(jnp.float32)       # (1,)  -> SMEM scalar

    grid = (b_pad // tile_b,)

    yT = pl.pallas_call(
        _fc_arn_kernel,
        out_shape=jax.ShapeDtypeStruct((1, b_pad), jnp.float32),
        grid=grid,
        in_specs=[
            pl.BlockSpec((D, tile_b), lambda i: (0, i)),      # x tiles over batch
            pl.BlockSpec((H, D), lambda i: (0, 0)),            # w1^T resident
            pl.BlockSpec((H, 1), lambda i: (0, 0)),            # b1 resident
            pl.BlockSpec((H, 1), lambda i: (0, 0)),            # w2 resident
            pl.BlockSpec(memory_space=pltpu.MemorySpace.SMEM), # b2 scalar
        ],
        out_specs=pl.BlockSpec((1, tile_b), lambda i: (0, i)),
        compiler_params=pltpu.CompilerParams(
            dimension_semantics=("parallel",),
            vmem_limit_bytes=32 * 1024 * 1024,
        ),
    )(xT, w1t, b1_col, w2_col, b2_s)

    return yT[:, :B].T  # (B, 1)


def stock_price_model_forward(x_price, params, state=None):
    """Forward pass of StockPriceModel with news_features=False.

    x_price: (batch, seq_len, 1) float32.  Returns (y, state) with y: (batch, 1).
    NOTE: for tiny batches this is launch-overhead dominated; amortize by
    batching many windows into a single call.
    """
    B, S, F = x_price.shape
    x = x_price.reshape(B, S * F)  # flatten(start_dim=1, end_dim=2)
    y = fc_arn_forward(x, params["w1"], params["b1"], params["w2"], params["b2"])
    return y, state


def init_params(key, seq_len, news_features=False, hidden=16):
    """Deterministic init mirroring nn.Linear's U(-1/sqrt(fan_in), 1/sqrt(fan_in))."""
    in_dim = (1 + 3 * int(news_features)) * seq_len
    k1, k2, k3, k4 = jax.random.split(key, 4)
    bound1 = 1.0 / math.sqrt(in_dim)
    bound2 = 1.0 / math.sqrt(hidden)
    return {
        "w1": jax.random.uniform(k1, (in_dim, hidden), jnp.float32, -bound1, bound1),
        "b1": jax.random.uniform(k2, (hidden,), jnp.float32, -bound1, bound1),
        "w2": jax.random.uniform(k3, (hidden, 1), jnp.float32, -bound2, bound2),
        "b2": jax.random.uniform(k4, (1,), jnp.float32, -bound2, bound2),
    }


def _ref_forward(x_price, params):
    x_flat = x_price.reshape(x_price.shape[0], -1)
    return jnp.tanh(x_flat @ params["w1"] + params["b1"]) @ params["w2"] + params["b2"]


# TODO(synk): news_features=True branch requires a pretrained FinBERT
# (AutoModelForSequenceClassification) — no in-script Pallas equivalent for a
# pretrained checkpoint, so only the news_features=False path is implemented.

if __name__ == "__main__":
    key = jax.random.PRNGKey(0)
    k_x, k_p, k_x2 = jax.random.split(key, 3)

    batch, seq_len = 2, 8
    # x_price: (batch, seq_len, 1 + 3*news_features) with news_features=False
    x_price = jax.random.normal(k_x, (batch, seq_len, 1), dtype=jnp.float32)
    params = init_params(k_p, seq_len, news_features=False)

    y, state = stock_price_model_forward(x_price, params, state=None)
    y = jax.block_until_ready(y)
    ref = _ref_forward(x_price, params)
    assert y.shape == (batch, 1)
    assert jnp.allclose(y, ref, atol=1e-5, rtol=1e-5)

    # Exercise the multi-tile (gridded, padded) path as well.
    big_batch = 260
    x_big = jax.random.normal(k_x2, (big_batch, seq_len, 1), dtype=jnp.float32)
    y_big = fc_arn_forward(
        x_big.reshape(big_batch, -1),
        params["w1"], params["b1"], params["w2"], params["b2"],
        max_tile_b=128,
    )
    y_big = jax.block_until_ready(y_big)
    ref_big = _ref_forward(x_big, params)
    assert y_big.shape == (big_batch, 1)
    assert jnp.allclose(y_big, ref_big, atol=1e-5, rtol=1e-5)

    print("KERNEL_OK")
</pallas_src>

<mosaic_0001>
module attributes {stable_mosaic.version = 11 : i64} {
  func.func @_fc_arn_kernel(%arg0: i32, %arg1: memref<8x128xf32, #tpu.memory_space<vmem>>, %arg2: memref<16x8xf32, #tpu.memory_space<vmem>>, %arg3: memref<16x1xf32, #tpu.memory_space<vmem>>, %arg4: memref<16x1xf32, #tpu.memory_space<vmem>>, %arg5: memref<1xf32, #tpu.memory_space<smem>>, %arg6: memref<1x128xf32, #tpu.memory_space<vmem>>) attributes {dimension_semantics = [#tpu.dimension_semantics<parallel>], iteration_bounds = array<i64: 1>, scalar_prefetch = 0 : i64, scratch_operands = 0 : i64, tpu.core_type = #tpu.core_type<tc>, window_params = [{transform_indices = @transform_0, window_bounds = array<i64: 8, 128>}, {pipeline_mode = #tpu.pipeline_mode<synchronous>, transform_indices = @transform_1, window_bounds = array<i64: 16, 8>}, {pipeline_mode = #tpu.pipeline_mode<synchronous>, transform_indices = @transform_2, window_bounds = array<i64: 16, 1>}, {pipeline_mode = #tpu.pipeline_mode<synchronous>, transform_indices = @transform_3, window_bounds = array<i64: 16, 1>}, {transform_indices = @transform_4, window_bounds = array<i64: 1>}, {transform_indices = @transform_5, window_bounds = array<i64: 1, 128>}]} {
    %c0 = arith.constant 0 : index
    %c0_0 = arith.constant 0 : index
    %0 = vector.load %arg2[%c0, %c0_0] : memref<16x8xf32, #tpu.memory_space<vmem>>, vector<16x8xf32>
    %c0_1 = arith.constant 0 : index
    %c0_2 = arith.constant 0 : index
    %1 = vector.load %arg1[%c0_1, %c0_2] : memref<8x128xf32, #tpu.memory_space<vmem>>, vector<8x128xf32>
    %cst = arith.constant dense<0.000000e+00> : vector<16x128xf32>
    %2 = tpu.matmul %0, %1, %cst {dimension_numbers = #tpu.dot_dimension_numbers<[1], [0], [0], [1], [0, 0, 1, 1], [], []>} : vector<16x8xf32>, vector<8x128xf32>, vector<16x128xf32> -> vector<16x128xf32>
    %c0_3 = arith.constant 0 : index
    %c0_4 = arith.constant 0 : index
    %3 = vector.load %arg3[%c0_3, %c0_4] : memref<16x1xf32, #tpu.memory_space<vmem>>, vector<16x1xf32>
    %4 = vector.broadcast %3 : vector<16x1xf32> to vector<16x128xf32>
    %5 = arith.addf %2, %4 : vector<16x128xf32>
    %6 = math.tanh %5 : vector<16x128xf32>
    %c0_5 = arith.constant 0 : index
    %c0_6 = arith.constant 0 : index
    %7 = vector.load %arg4[%c0_5, %c0_6] : memref<16x1xf32, #tpu.memory_space<vmem>>, vector<16x1xf32>
    %8 = vector.broadcast %7 : vector<16x1xf32> to vector<16x128xf32>
    %9 = arith.mulf %6, %8 : vector<16x128xf32>
    %cst_7 = arith.constant dense<0.000000e+00> : vector<128xf32>
    %10 = vector.multi_reduction <add>, %9, %cst_7 [0] : vector<16x128xf32> to vector<128xf32>
    %11 = vector.shape_cast %10 : vector<128xf32> to vector<1x128xf32>
    %c0_8 = arith.constant 0 : index
    %12 = memref.load %arg5[%c0_8] : memref<1xf32, #tpu.memory_space<smem>>
    %13 = vector.broadcast %12 : f32 to vector<1x128xf32>
    %14 = arith.addf %11, %13 : vector<1x128xf32>
    %c0_9 = arith.constant 0 : index
    %c0_10 = arith.constant 0 : index
    %15 = vector.load %arg6[%c0_9, %c0_10] : memref<1x128xf32, #tpu.memory_space<vmem>>, vector<1x128xf32>
    tpu.vector_store %arg6[%c0_9, %c0_10], %14 {strides = array<i32>} : memref<1x128xf32, #tpu.memory_space<vmem>>, vector<1x128xf32>,
    return
  }
  func.func @transform_0(%arg0: i32) -> (i32, i32) {
    %c0_i32 = arith.constant 0 : i32
    %c0_i32_0 = arith.constant 0 : i32
    return %c0_i32, %arg0 : i32, i32
  }
  func.func @transform_1(%arg0: i32) -> (i32, i32) {
    %c0_i32 = arith.constant 0 : i32
    %c0_i32_0 = arith.constant 0 : i32
    %c0_i32_1 = arith.constant 0 : i32
    return %c0_i32, %c0_i32_0 : i32, i32
  }
  func.func @transform_2(%arg0: i32) -> (i32, i32) {
    %c0_i32 = arith.constant 0 : i32
    %c0_i32_0 = arith.constant 0 : i32
    %c0_i32_1 = arith.constant 0 : i32
    return %c0_i32, %c0_i32_0 : i32, i32
  }
  func.func @transform_3(%arg0: i32) -> (i32, i32) {
    %c0_i32 = arith.constant 0 : i32
    %c0_i32_0 = arith.constant 0 : i32
    %c0_i32_1 = arith.constant 0 : i32
    return %c0_i32, %c0_i32_0 : i32, i32
  }
  func.func @transform_4(%arg0: i32) -> i32 {
    %c0_i32 = arith.constant 0 : i32
    %c0_i32_0 = arith.constant 0 : i32
    return %c0_i32 : i32
  }
  func.func @transform_5(%arg0: i32) -> (i32, i32) {
    %c0_i32 = arith.constant 0 : i32
    %c0_i32_0 = arith.constant 0 : i32
    return %c0_i32, %arg0 : i32, i32
  }
}

</mosaic_0001>

<llo_original>
// kernel: tpu_custom_call.1
$region0: #{tpu_custom_call.1}
  #allocation0 [shape = 'u32[]', space=smem, size = 0x4, offset = 0x4, fixed_abs, tag = 'smem constant byte address 0x4 - core index']
  #allocation1 [shape = 'u32[72,128]{1,0:T(1,128)}', space=vmem, size = 0x9000, scoped, tag = 'internal scratch']
  #allocation2 [shape = 'f32[1]{0:T(128)S(6)}', space=smem, size = 0x200, scoped, tag = 'scoped memory for tpu_custom_call.1']
  %s0 = inlined_call_operand.vmem [shape: f32[8,128], index: 0, kind: input, shape index: {}]
  %s1 = inlined_call_operand.vmem [shape: f32[16,8], index: 1, kind: input, shape index: {}]
  %s2 = inlined_call_operand.vmem [shape: f32[16,1], index: 2, kind: input, shape index: {}]
  %s3 = inlined_call_operand.vmem [shape: f32[16,1], index: 3, kind: input, shape index: {}]
  %s4 = inlined_call_operand.<no memory space> [shape: f32[1], index: 4, kind: input, shape index: {}]
  %s5 = inlined_call_operand.hbm [shape: f32[1,128], index: 5, kind: output, shape index: {}]
  %s6 = sld [smem:[#allocation0]]
  $region30: #{tpu_custom_call.1} parent=0
    _
  %s8 = ssub.s32 1, %s6
  %s9 = scalar_select 0, %s8, %s6
  %10 = sst [smem:[#allocation2]] %s4
  $region1: #{tpu_custom_call.1} parent=0
    #allocation3 [shape = 'u8[512]{0}', space=vmem, size = 0x400, scoped, tag = 'output window, operand 0, single buffered']
    #allocation4 [shape = 's32[1]{0}', space=sflag, size = 0x4, scoped, tag = 'scoped memory for tpu_custom_call.1']
    %11 = vsyncpa [#allocation4], 0
    // Predicated region
    $region2: #{tpu_custom_call.1} parent=1 // pred_check
      _
    $region3: #{tpu_custom_call.1} parent=1 // pred_check_branch
      %13 = sbr.rel (0) target = $region5
    $region4: #{tpu_custom_call.1} parent=1 // pred_region
      _
    $region5: #{tpu_custom_call.1} parent=1 // pred_fallthru
      _
    // Predicated region
    $region6: #{tpu_custom_call.1} parent=1 // pred_check
      _
    $region7: #{tpu_custom_call.1} parent=1 // pred_check_branch
      %15 = sbr.rel (0) target = $region9
    $region8: #{tpu_custom_call.1} parent=1 // pred_region
      _
    $region9: #{tpu_custom_call.1} parent=1 // pred_fallthru
      _
    // Predicated region
    $region10: #{tpu_custom_call.1} parent=1 // pred_check
      _
    $region11: #{tpu_custom_call.1} parent=1 // pred_check_branch
      %17 = sbr.rel (0) target = $region13
    $region12: #{tpu_custom_call.1} parent=1 // pred_region
      _
    $region13: #{tpu_custom_call.1} parent=1 // pred_fallthru
      _
    // Predicated region
    $region14: #{tpu_custom_call.1} parent=1 // pred_check
      _
    $region15: #{tpu_custom_call.1} parent=1 // pred_check_branch
      %19 = sbr.rel (0) target = $region17
    $region16: #{tpu_custom_call.1} parent=1 // pred_region
      _
    $region17: #{tpu_custom_call.1} parent=1 // pred_fallthru
      _
    // Predicated region
    $region18: #{tpu_custom_call.1} parent=1 // pred_check
      _
    $region19: #{tpu_custom_call.1} parent=1 // pred_check_branch
      %21 = sbr.rel (0) target = $region21
    $region20: #{tpu_custom_call.1} parent=1 // pred_region
      _
    $region21: #{tpu_custom_call.1} parent=1 // pred_fallthru
      _
    %v22 = vld [vmem:[%s1] sm:$0xff]
    %v23 = vld [vmem:[%s1 + $0x8] sm:$0xff]
    %v24 = vld [vmem:[%s0] sm:$0xff]
    %v25 = vld [vmem:[%s2] sm:$0xff]
    %v26 = vld [vmem:[%s2 + $0x8] sm:$0xff]
    %28 = vset.pattern.permute.xlu0 0
    %29 = vperm.xlu0 %28, %v25
    %v30 = vpop.permute.xlu0 %29
    %33 = vset.pattern.permute.xlu0 0
    %34 = vperm.xlu0 %33, %v26
    %v35 = vpop.permute.xlu0 %34
    %vm37 = vcmask 64512
    %v39 = vsel %vm37, %v22, 0
    %v42 = vsel %vm37, %v23, 0
    %44 = vmatpush.msra.mxu0 0.0
    %45 = vmatpush.msra.mxu0 0.0
    %46 = vmatpush.msra.mxu0 0.0
    %47 = vmatpush.msra.mxu0 0.0
    %48 = vmatpush.msra.mxu0 0.0
    %49 = vmatpush.msra.mxu0 0.0
    %50 = vmatpush.msra.mxu0 0.0
    %51 = vmatpush.msra.mxu0 0.0
    %52 = vmatpush.msra.mxu0 0.0
    %53 = vmatpush.msra.mxu0 0.0
    %54 = vmatpush.msra.mxu0 0.0
    %55 = vmatpush.msra.mxu0 0.0
    %56 = vmatpush.msra.mxu0 0.0
    %57 = vmatpush.msra.mxu0 0.0
    %58 = vmatpush.msra.mxu0 0.0
    %59 = vmatpush.msra.mxu0 %v24
    %60 = vmatmul.f32.gmra.mxu0 %v39
    %v61 = vpop.f32.mrf.mxu0
    %v62 = vadd.f32 %v30, %v61
    %63 = vmatmul.f32.gmra.mxu0 %v42
    %v64 = vpop.f32.mrf.mxu0
    %v65 = vadd.f32 %v35, %v64
    %66 = vdwg.mxu0
    %v67 = vtanh.pop %v62
    %v68 = vtanh.pop %v65
    %v69 = vld [vmem:[%s3] sm:$0xff]
    %v70 = vld [vmem:[%s3 + $0x8] sm:$0xff]
    %72 = vset.pattern.permute.xlu0 0
    %73 = vperm.xlu0 %72, %v69
    %v74 = vpop.permute.xlu0 %73
    %77 = vset.pattern.permute.xlu0 0
    %78 = vperm.xlu0 %77, %v70
    %v79 = vpop.permute.xlu0 %78
    %v81 = vmul.f32 %v67, %v74
    %v82 = vmul.f32 %v68, %v79
    %v83 = vadd.f32 %v81, %v82
    %v84 = vrot.slane %v83, 4
    %v85 = vadd.f32 %v83, %v84
    %v86 = vrot.slane %v85, 2
    %v87 = vadd.f32 %v85, %v86
    %v88 = vrot.slane %v87, 1
    %v89 = vadd.f32 %v87, %v88
    %s90 = sld [smem:[#allocation2]]
    %v91 = vstv %s90
    %v92 = vadd.f32 %v89, %v91
    %93 = vst [vmem:[#allocation3] sm:$0x1] %v92
    // Predicated region
    $region22: #{tpu_custom_call.1} parent=1 // pred_check
      _
    $region23: #{tpu_custom_call.1} parent=1 // pred_check_branch
      %95 = sbr.rel (0) target = $region25
    $region24: #{tpu_custom_call.1} parent=1 // pred_region
      %97 = vsyncadd [#allocation4], 0
      %s99 = sshll.u32 [#allocation3], 4
      %s100 = int_to_ptr.vmem [resolvable:$true] %s99
      %s101 = sshll.u32 %s5, 4
      %s102 = int_to_ptr.hbm [resolvable:$true] %s101
      %104 = dma.vmem_to_hbm [thread:$0]  %s100, 16, %s102, [#allocation4]
    $region25: #{tpu_custom_call.1} parent=1 // pred_fallthru
      _
    // Predicated region
    $region26: #{tpu_custom_call.1} parent=1 // pred_check
      _
    $region27: #{tpu_custom_call.1} parent=1 // pred_check_branch
      %106 = sbr.rel (0) target = $region29
    $region28: #{tpu_custom_call.1} parent=1 // pred_region
      %108 = dma.done [#allocation4], 16
    $region29: #{tpu_custom_call.1} parent=1 // pred_fallthru
      _
    %109 = vsyncpa [#allocation4], 1

</llo_original>
